<compile_context>
chip_gen: v5e
topology: v5e:2x2
jax: 0.10.0
libtpu: 0.0.40
codegen_flags: <defaults>
</compile_context>

<pallas_src>
import jax
import jax.numpy as jnp
from jax.experimental import pallas as pl
from jax.experimental.pallas import tpu as pltpu

_LANE = 128
_TARGET_BLOCK_ROWS = 4096  # 4096 x 128 x 4 B = 2 MiB per f32 buffer


def _round_up(a, m):
    return ((a + m - 1) // m) * m


def _mish_kernel(x_ref, o_ref):
    x = x_ref[...]
    xf = x.astype(jnp.float32)
    # tanh(softplus(x)) rewritten with one exp:
    #   z = 1 + exp(x);  tanh(log(z)) = (z^2 - 1) / (z^2 + 1)
    # stabilized with e = exp(-|x|) in (0, 1]:
    #   x >= 0: ((1+e)^2 - e^2) / ((1+e)^2 + e^2)
    #   x <  0: ((1+e)^2 - 1  ) / ((1+e)^2 + 1  )
    # denominator is in (1, 5] -> exact divide is safe and accurate.
    e = jnp.exp(-jnp.abs(xf))
    d = (1.0 + e) * (1.0 + e)
    w = jnp.where(xf >= 0.0, e * e, 1.0)
    tanh_sp = (d - w) / (d + w)
    o_ref[...] = (xf * tanh_sp).astype(o_ref.dtype)


def _mish_jnp(x):
    # Same math as the kernel, for the tiny non-lane-aligned tail.
    xf = x.astype(jnp.float32)
    e = jnp.exp(-jnp.abs(xf))
    d = (1.0 + e) * (1.0 + e)
    w = jnp.where(xf >= 0.0, e * e, 1.0)
    return (xf * (d - w) / (d + w)).astype(x.dtype)


def _mish_2d(x2d):
    rows, lane = x2d.shape
    if rows >= 64:
        # Big path: ~2 MiB blocks, >= 2 grid steps (v7x two-TC sharding),
        # block rows a multiple of 32 sublanes (safe for f32/bf16/int8).
        block_rows = min(_TARGET_BLOCK_ROWS, _round_up(pl.cdiv(rows, 2), 32))
    else:
        # Small input: one block equal to the full array extent.
        block_rows = rows
    grid = (pl.cdiv(rows, block_rows),)

    return pl.pallas_call(
        _mish_kernel,
        out_shape=jax.ShapeDtypeStruct((rows, lane), x2d.dtype),
        grid_spec=pltpu.PrefetchScalarGridSpec(
            num_scalar_prefetch=0,
            grid=grid,
            in_specs=[pl.BlockSpec((block_rows, lane), lambda i: (i, 0))],
            out_specs=pl.BlockSpec((block_rows, lane), lambda i: (i, 0)),
        ),
        compiler_params=pltpu.CompilerParams(
            dimension_semantics=("parallel",),
        ),
    )(x2d)


def mish(x):
    """Mish activation: x * tanh(softplus(x)). Elementwise, any shape."""
    orig_shape = x.shape
    n = x.size
    x_flat = jnp.ravel(x)
    rows = n // _LANE
    n_main = rows * _LANE

    if rows == 0:
        # Fewer than 128 elements: not worth a kernel launch.
        return _mish_jnp(x_flat).reshape(orig_shape)

    if n_main == n:
        # Common case: lane-aligned flat length -> contiguous reshape, no pad.
        out2d = _mish_2d(x_flat.reshape(rows, _LANE))
        return out2d.reshape(orig_shape)

    # Ragged case: kernel on the 128-aligned prefix, plain jnp on the tail
    # (< 128 elements) — avoids materializing a padded full-array copy.
    main = _mish_2d(x_flat[:n_main].reshape(rows, _LANE)).reshape(-1)
    tail = _mish_jnp(x_flat[n_main:])
    return jnp.concatenate([main, tail]).reshape(orig_shape)


def _mish_ref(x):
    # Straightforward reference matching torch: x * tanh(softplus(x)),
    # softplus(x) = x for x > 20, else log1p(exp(x)) (stable form).
    xf = x.astype(jnp.float32)
    sp = jnp.where(
        xf > 20.0,
        xf,
        jnp.maximum(xf, 0.0) + jnp.log1p(jnp.exp(-jnp.abs(xf))),
    )
    return (xf * jnp.tanh(sp)).astype(x.dtype)


if __name__ == "__main__":
    key = jax.random.PRNGKey(0)

    # NCHW input, as the PyTorch module would receive (lane-aligned path).
    x = jax.random.normal(key, (2, 4, 16, 16), dtype=jnp.float32) * 3.0
    y = jax.block_until_ready(mish(x))
    y_ref = _mish_ref(x)
    assert y.shape == x.shape and y.dtype == x.dtype
    assert jnp.allclose(y, y_ref, atol=1e-5, rtol=1e-5)

    # Ragged-length input (exercises the prefix-kernel + jnp-tail path).
    x2 = jax.random.normal(jax.random.PRNGKey(1), (5, 131), dtype=jnp.float32) * 4.0
    y2 = jax.block_until_ready(mish(x2))
    assert y2.shape == x2.shape and y2.dtype == x2.dtype
    assert jnp.allclose(y2, _mish_ref(x2), atol=1e-5, rtol=1e-5)

    print("KERNEL_OK")
</pallas_src>

<mosaic_0001>
module attributes {stable_mosaic.version = 11 : i64} {
  func.func @_mish_kernel(%arg0: i32, %arg1: memref<16x128xf32, #tpu.memory_space<vmem>>, %arg2: memref<16x128xf32, #tpu.memory_space<vmem>>) attributes {dimension_semantics = [#tpu.dimension_semantics<parallel>], iteration_bounds = array<i64: 1>, scalar_prefetch = 0 : i64, scratch_operands = 0 : i64, tpu.core_type = #tpu.core_type<tc>, window_params = [{transform_indices = @transform_0, window_bounds = array<i64: 16, 128>}, {transform_indices = @transform_1, window_bounds = array<i64: 16, 128>}]} {
    %c0 = arith.constant 0 : index
    %c0_0 = arith.constant 0 : index
    %0 = vector.load %arg1[%c0, %c0_0] : memref<16x128xf32, #tpu.memory_space<vmem>>, vector<16x128xf32>
    %1 = math.absf %0 : vector<16x128xf32>
    %cst = arith.constant 0.000000e+00 : f32
    %2 = vector.broadcast %cst : f32 to vector<16x128xf32>
    %3 = arith.subf %2, %1 : vector<16x128xf32>
    %4 = math.exp %3 : vector<16x128xf32>
    %cst_1 = arith.constant 1.000000e+00 : f32
    %5 = vector.broadcast %cst_1 : f32 to vector<16x128xf32>
    %6 = arith.addf %5, %4 : vector<16x128xf32>
    %cst_2 = arith.constant 1.000000e+00 : f32
    %7 = vector.broadcast %cst_2 : f32 to vector<16x128xf32>
    %8 = arith.addf %7, %4 : vector<16x128xf32>
    %9 = arith.mulf %6, %8 : vector<16x128xf32>
    %cst_3 = arith.constant 0.000000e+00 : f32
    %10 = vector.broadcast %cst_3 : f32 to vector<16x128xf32>
    %11 = arith.cmpf oge, %0, %10 : vector<16x128xf32>
    %12 = arith.mulf %4, %4 : vector<16x128xf32>
    %cst_4 = arith.constant 1.000000e+00 : f32
    %13 = vector.broadcast %cst_4 : f32 to vector<16x128xf32>
    %14 = arith.select %11, %12, %13 : vector<16x128xi1>, vector<16x128xf32>
    %15 = arith.subf %9, %14 : vector<16x128xf32>
    %16 = arith.addf %9, %14 : vector<16x128xf32>
    %17 = arith.divf %15, %16 : vector<16x128xf32>
    %18 = arith.mulf %0, %17 : vector<16x128xf32>
    %c0_5 = arith.constant 0 : index
    %c0_6 = arith.constant 0 : index
    %19 = vector.load %arg2[%c0_5, %c0_6] : memref<16x128xf32, #tpu.memory_space<vmem>>, vector<16x128xf32>
    tpu.vector_store %arg2[%c0_5, %c0_6], %18 {strides = array<i32>} : memref<16x128xf32, #tpu.memory_space<vmem>>, vector<16x128xf32>,
    return
  }
  func.func @transform_0(%arg0: i32) -> (i32, i32) {
    %c0_i32 = arith.constant 0 : i32
    %c0_i32_0 = arith.constant 0 : i32
    return %arg0, %c0_i32 : i32, i32
  }
  func.func @transform_1(%arg0: i32) -> (i32, i32) {
    %c0_i32 = arith.constant 0 : i32
    %c0_i32_0 = arith.constant 0 : i32
    return %arg0, %c0_i32 : i32, i32
  }
}

</mosaic_0001>

<llo_original>
// kernel: tpu_custom_call.1
$region0: #{tpu_custom_call.1}
  #allocation0 [shape = 'u32[]', space=smem, size = 0x4, offset = 0x4, fixed_abs, tag = 'smem constant byte address 0x4 - core index']
  #allocation1 [shape = 'u32[72,128]{1,0:T(1,128)}', space=vmem, size = 0x9000, scoped, tag = 'internal scratch']
  %s0 = inlined_call_operand.hbm [shape: f32[16,128], index: 0, kind: input, shape index: {}]
  %s1 = inlined_call_operand.hbm [shape: f32[16,128], index: 1, kind: output, shape index: {}]
  %s2 = sld [smem:[#allocation0]]
  $region18: #{tpu_custom_call.1} parent=0
    _
  %s4 = ssub.s32 1, %s2
  %s5 = scalar_select 0, %s4, %s2
  $region1: #{tpu_custom_call.1} parent=0
    #allocation2 [shape = 'u8[8192]{0}', space=vmem, size = 0x2000, scoped, tag = 'input window, operand 0, single buffered']
    #allocation3 [shape = 's32[1]{0}', space=sflag, size = 0x4, scoped, tag = 'scoped memory for tpu_custom_call.1']
    #allocation4 [shape = 's32[1]{0}', space=sflag, size = 0x4, scoped, tag = 'scoped memory for tpu_custom_call.1']
    #allocation5 [shape = 'u8[8192]{0}', space=vmem, size = 0x2000, scoped, tag = 'output window, operand 0, single buffered']
    %6 = vsyncpa [#allocation3], 0
    %7 = vsyncpa [#allocation4], 0
    // Predicated region
    $region2: #{tpu_custom_call.1} parent=1 // pred_check
      _
    $region3: #{tpu_custom_call.1} parent=1 // pred_check_branch
      %9 = sbr.rel (0) target = $region5
    $region4: #{tpu_custom_call.1} parent=1 // pred_region
      %11 = vsyncadd [#allocation3], 0
      %s12 = sshll.u32 %s0, 4
      %s13 = int_to_ptr.hbm [resolvable:$true] %s12
      %s14 = sshll.u32 [#allocation2], 4
      %s15 = int_to_ptr.vmem [resolvable:$true] %s14
      %20 = dma.hbm_to_vmem [thread:$0]  %s13, 256, %s15, [#allocation3], 128, 128, 8
    $region5: #{tpu_custom_call.1} parent=1 // pred_fallthru
      _
    // Predicated region
    $region6: #{tpu_custom_call.1} parent=1 // pred_check
      _
    $region7: #{tpu_custom_call.1} parent=1 // pred_check_branch
      %22 = sbr.rel (0) target = $region9
    $region8: #{tpu_custom_call.1} parent=1 // pred_region
      %24 = dma.done [#allocation3], 256
    $region9: #{tpu_custom_call.1} parent=1 // pred_fallthru
      _
    %v25 = vld [vmem:[#allocation2] sm:$0xff]
    %v26 = vld [vmem:[#allocation2 + $0x8] sm:$0xff]
    %v27 = vand.u32 2147483647, %v25
    %v28 = vand.u32 2147483647, %v26
    %v29 = vsub.f32 0.0, %v27
    %v30 = vsub.f32 0.0, %v28
    %v31 = vmul.f32 %v29, 1.442695
    %v32 = vpow.pop %v31
    %v33 = vmul.f32 %v30, 1.442695
    %v34 = vpow.pop %v33
    %v35 = vadd.f32 %v32, 1.0
    %v36 = vadd.f32 %v34, 1.0
    %v37 = vmul.f32 %v35, %v35
    %v38 = vmul.f32 %v36, %v36
    %vm39 = vcmp.ge.f32.partialorder %v25, 0.0
    %vm40 = vcmp.ge.f32.partialorder %v26, 0.0
    %v41 = vmul.f32 %v32, %v32
    %v42 = vmul.f32 %v34, %v34
    %v43 = vsel %vm39, %v41, 1.0
    %v44 = vsel %vm40, %v42, 1.0
    %v45 = vsub.f32 %v37, %v43
    %v46 = vsub.f32 %v38, %v44
    %v47 = vadd.f32 %v37, %v43
    %v48 = vadd.f32 %v38, %v44
    %v49 = vrcp.pop %v47
    %v50 = vmul.f32 %v47, %v49
    %v51 = vsub.f32 1.0, %v50
    %v52 = vmul.f32 %v49, %v51
    %v53 = vadd.f32 %v49, %v52
    %vm54 = vweird.f32 %v47
    %vm55 = vweird.f32 %v49
    %vm56 = vmor %vm54, %vm55
    %v57 = vsel %vm56, %v49, %v53
    %v58 = vand.u32 2147483647, %v47
    %vm59 = vcmp.eq.f32.partialorder %v58, 8.507059e+37
    %v60 = vand.u32 %v47, 2147483648
    %v61 = vor.u32 1.1754944e-38, %v60
    %v62 = vsel %vm59, %v61, %v57
    %v63 = vmul.f32 %v45, %v62
    %v64 = vrcp.pop %v48
    %v65 = vmul.f32 %v48, %v64
    %v66 = vsub.f32 1.0, %v65
    %v67 = vmul.f32 %v64, %v66
    %v68 = vadd.f32 %v64, %v67
    %vm69 = vweird.f32 %v48
    %vm70 = vweird.f32 %v64
    %vm71 = vmor %vm69, %vm70
    %v72 = vsel %vm71, %v64, %v68
    %v73 = vand.u32 2147483647, %v48
    %vm74 = vcmp.eq.f32.partialorder %v73, 8.507059e+37
    %v75 = vand.u32 %v48, 2147483648
    %v76 = vor.u32 1.1754944e-38, %v75
    %v77 = vsel %vm74, %v76, %v72
    %v78 = vmul.f32 %v46, %v77
    %v79 = vmul.f32 %v25, %v63
    %v80 = vmul.f32 %v26, %v78
    %81 = vst [vmem:[#allocation5] sm:$0xff] %v79
    %82 = vst [vmem:[#allocation5 + $0x8] sm:$0xff] %v80
    // Predicated region
    $region10: #{tpu_custom_call.1} parent=1 // pred_check
      _
    $region11: #{tpu_custom_call.1} parent=1 // pred_check_branch
      %84 = sbr.rel (0) target = $region13
    $region12: #{tpu_custom_call.1} parent=1 // pred_region
      %86 = vsyncadd [#allocation4], 0
      %s87 = sshll.u32 [#allocation5], 4
      %s88 = int_to_ptr.vmem [resolvable:$true] %s87
      %s89 = sshll.u32 %s1, 4
      %s90 = int_to_ptr.hbm [resolvable:$true] %s89
      %95 = dma.vmem_to_hbm [thread:$0]  %s88, 256, %s90, [#allocation4], 128, 128, 8
    $region13: #{tpu_custom_call.1} parent=1 // pred_fallthru
      _
    // Predicated region
    $region14: #{tpu_custom_call.1} parent=1 // pred_check
      _
    $region15: #{tpu_custom_call.1} parent=1 // pred_check_branch
      %97 = sbr.rel (0) target = $region17
    $region16: #{tpu_custom_call.1} parent=1 // pred_region
      %99 = dma.done [#allocation4], 256
    $region17: #{tpu_custom_call.1} parent=1 // pred_fallthru
      _
    %100 = vsyncpa [#allocation3], 1
    %101 = vsyncpa [#allocation4], 1

</llo_original>
